<compile_context>
chip_gen: v5e
topology: v5e:2x2
jax: 0.10.0
libtpu: 0.0.40
codegen_flags: <defaults>
</compile_context>

<pallas_src>
import functools

import jax
import jax.numpy as jnp
from jax.experimental import pallas as pl
from jax.experimental.pallas import tpu as pltpu


def _cdiv(a, b):
    return -(-a // b)


def _round_up(x, m):
    return ((x + m - 1) // m) * m


def _ls_nll_kernel(lp_ref, tgt_ref, sum_out_ref, pick_out_ref, sum_acc, pick_acc, *,
                   V, tile_v, need_v_mask):
    vi = pl.program_id(2)
    n_v = pl.num_programs(2)

    lp = lp_ref[0]          # (tile_v, tile_t), native dtype (f32 or bf16) -- no full-tile cast
    tgt = tgt_ref[0]        # (1, tile_t), int32
    tv, tt = lp.shape

    @pl.when(vi == 0)
    def _init():
        sum_acc[...] = jnp.zeros_like(sum_acc)
        pick_acc[...] = jnp.zeros_like(pick_acc)

    # Relative class ids of this V block live on the sublane axis: small (tile_v, 1) iota,
    # compared against (tgt - vi*tile_v) -- avoids a full-tile iota + full-tile add.
    vrel = jax.lax.broadcasted_iota(jnp.int32, (tv, 1), 0)

    if need_v_mask:
        # Ragged vocab tail: OOB sublanes of this block hold garbage -- zero them before
        # they can reach either accumulator (0 * NaN would poison the result).
        lp_valid = jnp.where(vrel < (V - vi * tile_v), lp, 0)
    else:
        lp_valid = lp

    # NLL "gather" without a materialized one-hot: compare + select. ignore_index (-100)
    # and any class id outside this block never match, so no extra mask is needed here.
    tgt_rel = tgt - vi * tile_v
    picked = jnp.where(vrel == tgt_rel, lp_valid, 0)

    if tv % 8 == 0:
        # Partial-reduce tile_v -> 8 sublanes with pure vreg adds (f32 accumulation); the
        # single cross-sublane XLU reduce is deferred to the once-per-row-block finalize.
        sum_acc[...] += jnp.sum(lp_valid.reshape(tv // 8, 8, tt), axis=0, dtype=jnp.float32)
        pick_acc[...] += jnp.sum(picked.reshape(tv // 8, 8, tt), axis=0, dtype=jnp.float32)
    else:
        sum_acc[...] += jnp.sum(lp_valid, axis=0, keepdims=True, dtype=jnp.float32)
        pick_acc[...] += jnp.sum(picked, axis=0, keepdims=True, dtype=jnp.float32)

    @pl.when(vi == n_v - 1)
    def _finalize():
        sum_out_ref[...] = jnp.sum(sum_acc[...], axis=0,
                                   keepdims=True).reshape(sum_out_ref.shape)
        pick_out_ref[...] = jnp.sum(pick_acc[...], axis=0,
                                    keepdims=True).reshape(pick_out_ref.shape)


def label_smoothing_nll_loss(log_preds, target, smoothing=0.1, ignore_index=-100,
                             tile_t=512, tile_v=None, block_bytes=8 * 1024 * 1024):
    """log_preds: [bs, V, T] float (f32 or bf16), target: [bs, T] int -> scalar float32.

    Matches LabelSmoothingNLLLoss(smoothing, reduction='mean', weight=None).
    The native [bs, V, T] layout is streamed directly (T on lanes, V as the reduction axis);
    tile_v is auto-sized so one input block is ~block_bytes (default 8 MiB).
    """
    bs, V, T = log_preds.shape
    itemsize = jnp.dtype(log_preds.dtype).itemsize

    # ---- lane (T) tile: multiple of 128, or the full dim when T <= 128 ----
    if T <= 128:
        tile_t = T
    else:
        tile_t = min(max(tile_t, 128) // 128 * 128, _round_up(T, 128))
        if bs * _cdiv(T, tile_t) < 2:
            # Keep >= 2 parallel blocks so both v7x TensorCores get work.
            tile_t = max(128, _round_up(_cdiv(T, 2), 128))
    n_t = _cdiv(T, tile_t)

    # ---- sublane (V) tile: sized so one input block is ~block_bytes (dtype-aware) ----
    if tile_v is None:
        tile_v = max(8, (block_bytes // max(1, tile_t * itemsize)) // 8 * 8)
    if tile_v >= V:
        tile_v = V                       # full dim is always a legal block extent
    else:
        tile_v = max(8, tile_v // 8 * 8)
    n_v = _cdiv(V, tile_v)
    need_v_mask = (V % tile_v) != 0
    acc_rows = 8 if (tile_v % 8 == 0) else 1

    # Only the tiny target tensor gets reshaped; the big log_preds tensor is untouched.
    tgt3 = target.reshape(bs, 1, T).astype(jnp.int32)

    kernel = functools.partial(_ls_nll_kernel, V=V, tile_v=tile_v, need_v_mask=need_v_mask)

    sum_lp, picked = pl.pallas_call(
        kernel,
        out_shape=(jax.ShapeDtypeStruct((bs, 1, T), jnp.float32),
                   jax.ShapeDtypeStruct((bs, 1, T), jnp.float32)),
        grid=(bs, n_t, n_v),
        in_specs=[
            pl.BlockSpec((1, tile_v, tile_t), lambda b, ti, vi: (b, vi, ti)),
            pl.BlockSpec((1, 1, tile_t), lambda b, ti, vi: (b, 0, ti)),
        ],
        out_specs=[
            pl.BlockSpec((1, 1, tile_t), lambda b, ti, vi: (b, 0, ti)),
            pl.BlockSpec((1, 1, tile_t), lambda b, ti, vi: (b, 0, ti)),
        ],
        scratch_shapes=[
            pltpu.VMEM((acc_rows, tile_t), jnp.float32),   # per-position sum of log_preds over V
            pltpu.VMEM((acc_rows, tile_t), jnp.float32),   # per-position log_pred at target class
        ],
        compiler_params=pltpu.CompilerParams(
            dimension_semantics=("parallel", "parallel", "arbitrary"),
            vmem_limit_bytes=48 * 1024 * 1024),
    )(log_preds, tgt3)

    sum_lp = sum_lp[:, 0, :]     # (bs, T) per-position sum_V log_preds (V tail masked in-kernel)
    picked = picked[:, 0, :]     # (bs, T) log_pred at target class (0 at ignored positions)

    maskf = (target != ignore_index).astype(jnp.float32)
    masked_sum = jnp.sum(sum_lp * maskf)
    nll_sum = jnp.sum(picked)    # ignored positions never match a class id -> already zero
    cnt = jnp.sum(maskf)

    # Denominator uses the *original* bs*V*T (ignored positions included), matching the module.
    loss = -masked_sum / jnp.float32(bs * V * T)
    nll = -nll_sum / cnt         # NaN if every position is ignore_index, same as F.nll_loss
    return jnp.float32(smoothing) * loss + jnp.float32(1.0 - smoothing) * nll


def _reference(log_preds, target, smoothing=0.1, ignore_index=-100):
    # Pure-JAX reference mirroring the PyTorch module (for correctness check only).
    bs, V, T = log_preds.shape
    maskf = (target != ignore_index).astype(jnp.float32)
    loss = jnp.mean(-jnp.mean(log_preds * maskf[:, None, :], axis=1))
    picked = jnp.take_along_axis(
        log_preds, jnp.clip(target, 0, V - 1)[:, None, :], axis=1
    )[:, 0, :]
    nll = jnp.sum(-picked * maskf) / jnp.sum(maskf)
    return smoothing * loss + (1.0 - smoothing) * nll


if __name__ == "__main__":
    key = jax.random.PRNGKey(0)

    def make_inputs(k, bs, V, T, dtype):
        k1, k2, k3 = jax.random.split(k, 3)
        logits = jax.random.normal(k1, (bs, V, T), dtype=jnp.float32)
        lp = jax.nn.log_softmax(logits, axis=1).astype(dtype)
        tgt = jax.random.randint(k2, (bs, T), 0, V, dtype=jnp.int32)
        ign = jax.random.bernoulli(k3, 0.2, (bs, T))
        tgt = jnp.where(ign, jnp.int32(-100), tgt)
        return lp, tgt

    ka, kb, kc = jax.random.split(key, 3)

    # Case 1: tiles == full dims (no ragged edges), f32, default tile selection.
    lp, tgt = make_inputs(ka, 2, 32, 48, jnp.float32)
    out = jax.block_until_ready(label_smoothing_nll_loss(lp, tgt))
    ref = _reference(lp.astype(jnp.float32), tgt)
    assert jnp.allclose(out, ref, atol=1e-4, rtol=1e-4), (out, ref)

    # Case 2: ragged V tail and ragged T block -> exercises in-kernel masking / OOB drop.
    lp, tgt = make_inputs(kb, 2, 20, 150, jnp.float32)
    out = jax.block_until_ready(label_smoothing_nll_loss(lp, tgt, tile_v=8))
    ref = _reference(lp.astype(jnp.float32), tgt)
    assert jnp.allclose(out, ref, atol=1e-4, rtol=1e-4), (out, ref)

    # Case 3: bf16 input streams at native width; f32 accumulation inside the kernel.
    lp, tgt = make_inputs(kc, 2, 24, 40, jnp.bfloat16)
    out = jax.block_until_ready(label_smoothing_nll_loss(lp, tgt, tile_v=16))
    ref = _reference(lp.astype(jnp.float32), tgt)
    assert jnp.allclose(out, ref, atol=1e-4, rtol=1e-4), (out, ref)

    print("KERNEL_OK")
</pallas_src>

<mosaic_0001>
module attributes {stable_mosaic.version = 11 : i64} {
  func.func @_ls_nll_kernel(%arg0: i32, %arg1: i32, %arg2: i32, %arg3: memref<1x32x48xf32, #tpu.memory_space<vmem>>, %arg4: memref<1x1x48xi32, #tpu.memory_space<vmem>>, %arg5: memref<1x1x48xf32, #tpu.memory_space<vmem>>, %arg6: memref<1x1x48xf32, #tpu.memory_space<vmem>>, %arg7: memref<8x48xf32, #tpu.memory_space<vmem>>, %arg8: memref<8x48xf32, #tpu.memory_space<vmem>>) attributes {dimension_semantics = [#tpu.dimension_semantics<parallel>, #tpu.dimension_semantics<parallel>, #tpu.dimension_semantics<arbitrary>], iteration_bounds = array<i64: 2, 1, 1>, scalar_prefetch = 0 : i64, scratch_operands = 2 : i64, tpu.core_type = #tpu.core_type<tc>, window_params = [{transform_indices = @transform_0, window_bounds = array<i64: 1, 32, 48>}, {transform_indices = @transform_1, window_bounds = array<i64: 1, 1, 48>}, {transform_indices = @transform_2, window_bounds = array<i64: 1, 1, 48>}, {transform_indices = @transform_3, window_bounds = array<i64: 1, 1, 48>}]} {
    %c0 = arith.constant 0 : index
    %c0_0 = arith.constant 0 : index
    %c0_1 = arith.constant 0 : index
    %0 = vector.load %arg3[%c0, %c0_0, %c0_1] : memref<1x32x48xf32, #tpu.memory_space<vmem>>, vector<1x32x48xf32>
    %1 = vector.shape_cast %0 : vector<1x32x48xf32> to vector<32x48xf32>
    %c0_2 = arith.constant 0 : index
    %c0_3 = arith.constant 0 : index
    %c0_4 = arith.constant 0 : index
    %2 = vector.load %arg4[%c0_2, %c0_3, %c0_4] : memref<1x1x48xi32, #tpu.memory_space<vmem>>, vector<1x1x48xi32>
    %3 = vector.shape_cast %2 : vector<1x1x48xi32> to vector<1x48xi32>
    %c0_i32 = arith.constant 0 : i32
    %4 = arith.cmpi eq, %arg2, %c0_i32 : i32
    %5 = arith.extui %4 : i1 to i32
    %c0_i32_5 = arith.constant 0 : i32
    %6 = arith.cmpi ne, %5, %c0_i32_5 : i32
    scf.if %6 {
      %cst_18 = arith.constant 0.000000e+00 : f32
      %30 = vector.broadcast %cst_18 : f32 to vector<8x48xf32>
      %c0_19 = arith.constant 0 : index
      %c0_20 = arith.constant 0 : index
      %31 = vector.load %arg7[%c0_19, %c0_20] : memref<8x48xf32, #tpu.memory_space<vmem>>, vector<8x48xf32>
      tpu.vector_store %arg7[%c0_19, %c0_20], %30 {strides = array<i32>} : memref<8x48xf32, #tpu.memory_space<vmem>>, vector<8x48xf32>,
      %cst_21 = arith.constant 0.000000e+00 : f32
      %32 = vector.broadcast %cst_21 : f32 to vector<8x48xf32>
      %c0_22 = arith.constant 0 : index
      %c0_23 = arith.constant 0 : index
      %33 = vector.load %arg8[%c0_22, %c0_23] : memref<8x48xf32, #tpu.memory_space<vmem>>, vector<8x48xf32>
      tpu.vector_store %arg8[%c0_22, %c0_23], %32 {strides = array<i32>} : memref<8x48xf32, #tpu.memory_space<vmem>>, vector<8x48xf32>,
    } else {
    }
    %7 = tpu.iota {dimensions = array<i32: 0>} : vector<32x1xi32>
    %c32_i32 = arith.constant 32 : i32
    %8 = arith.muli %arg2, %c32_i32 : i32
    %9 = vector.broadcast %8 : i32 to vector<1x48xi32>
    %10 = arith.subi %3, %9 : vector<1x48xi32>
    %11 = vector.broadcast %7 : vector<32x1xi32> to vector<32x48xi32>
    %12 = vector.broadcast %10 : vector<1x48xi32> to vector<32x48xi32>
    %13 = arith.cmpi eq, %11, %12 : vector<32x48xi32>
    %c0_i32_6 = arith.constant 0 : i32
    %14 = arith.sitofp %c0_i32_6 : i32 to f32
    %15 = vector.broadcast %14 : f32 to vector<32x48xf32>
    %16 = arith.select %13, %1, %15 : vector<32x48xi1>, vector<32x48xf32>
    %c0_7 = arith.constant 0 : index
    %c0_8 = arith.constant 0 : index
    %17 = vector.load %arg7[%c0_7, %c0_8] : memref<8x48xf32, #tpu.memory_space<vmem>>, vector<8x48xf32>
    %18 = vector.shape_cast %1 : vector<32x48xf32> to vector<4x8x48xf32>
    %cst = arith.constant dense<0.000000e+00> : vector<8x48xf32>
    %19 = vector.multi_reduction <add>, %18, %cst [0] : vector<4x8x48xf32> to vector<8x48xf32>
    %20 = arith.addf %17, %19 : vector<8x48xf32>
    %c0_9 = arith.constant 0 : index
    %c0_10 = arith.constant 0 : index
    %21 = vector.load %arg7[%c0_9, %c0_10] : memref<8x48xf32, #tpu.memory_space<vmem>>, vector<8x48xf32>
    tpu.vector_store %arg7[%c0_9, %c0_10], %20 {strides = array<i32>} : memref<8x48xf32, #tpu.memory_space<vmem>>, vector<8x48xf32>,
    %c0_11 = arith.constant 0 : index
    %c0_12 = arith.constant 0 : index
    %22 = vector.load %arg8[%c0_11, %c0_12] : memref<8x48xf32, #tpu.memory_space<vmem>>, vector<8x48xf32>
    %23 = vector.shape_cast %16 : vector<32x48xf32> to vector<4x8x48xf32>
    %cst_13 = arith.constant dense<0.000000e+00> : vector<8x48xf32>
    %24 = vector.multi_reduction <add>, %23, %cst_13 [0] : vector<4x8x48xf32> to vector<8x48xf32>
    %25 = arith.addf %22, %24 : vector<8x48xf32>
    %c0_14 = arith.constant 0 : index
    %c0_15 = arith.constant 0 : index
    %26 = vector.load %arg8[%c0_14, %c0_15] : memref<8x48xf32, #tpu.memory_space<vmem>>, vector<8x48xf32>
    tpu.vector_store %arg8[%c0_14, %c0_15], %25 {strides = array<i32>} : memref<8x48xf32, #tpu.memory_space<vmem>>, vector<8x48xf32>,
    %c0_i32_16 = arith.constant 0 : i32
    %27 = arith.cmpi eq, %arg2, %c0_i32_16 : i32
    %28 = arith.extui %27 : i1 to i32
    %c0_i32_17 = arith.constant 0 : i32
    %29 = arith.cmpi ne, %28, %c0_i32_17 : i32
    scf.if %29 {
      %c0_18 = arith.constant 0 : index
      %c0_19 = arith.constant 0 : index
      %30 = vector.load %arg7[%c0_18, %c0_19] : memref<8x48xf32, #tpu.memory_space<vmem>>, vector<8x48xf32>
      %cst_20 = arith.constant dense<0.000000e+00> : vector<48xf32>
      %31 = vector.multi_reduction <add>, %30, %cst_20 [0] : vector<8x48xf32> to vector<48xf32>
      %32 = vector.shape_cast %31 : vector<48xf32> to vector<1x48xf32>
      %33 = vector.shape_cast %32 : vector<1x48xf32> to vector<1x1x48xf32>
      %c0_21 = arith.constant 0 : index
      %c0_22 = arith.constant 0 : index
      %c0_23 = arith.constant 0 : index
      %34 = vector.load %arg5[%c0_21, %c0_22, %c0_23] : memref<1x1x48xf32, #tpu.memory_space<vmem>>, vector<1x1x48xf32>
      tpu.vector_store %arg5[%c0_21, %c0_22, %c0_23], %33 {strides = array<i32>} : memref<1x1x48xf32, #tpu.memory_space<vmem>>, vector<1x1x48xf32>,
      %c0_24 = arith.constant 0 : index
      %c0_25 = arith.constant 0 : index
      %35 = vector.load %arg8[%c0_24, %c0_25] : memref<8x48xf32, #tpu.memory_space<vmem>>, vector<8x48xf32>
      %cst_26 = arith.constant dense<0.000000e+00> : vector<48xf32>
      %36 = vector.multi_reduction <add>, %35, %cst_26 [0] : vector<8x48xf32> to vector<48xf32>
      %37 = vector.shape_cast %36 : vector<48xf32> to vector<1x48xf32>
      %38 = vector.shape_cast %37 : vector<1x48xf32> to vector<1x1x48xf32>
      %c0_27 = arith.constant 0 : index
      %c0_28 = arith.constant 0 : index
      %c0_29 = arith.constant 0 : index
      %39 = vector.load %arg6[%c0_27, %c0_28, %c0_29] : memref<1x1x48xf32, #tpu.memory_space<vmem>>, vector<1x1x48xf32>
      tpu.vector_store %arg6[%c0_27, %c0_28, %c0_29], %38 {strides = array<i32>} : memref<1x1x48xf32, #tpu.memory_space<vmem>>, vector<1x1x48xf32>,
    } else {
    }
    return
  }
  func.func @transform_0(%arg0: i32, %arg1: i32, %arg2: i32) -> (i32, i32, i32) {
    %c0_i32 = arith.constant 0 : i32
    return %arg0, %arg2, %arg1 : i32, i32, i32
  }
  func.func @transform_1(%arg0: i32, %arg1: i32, %arg2: i32) -> (i32, i32, i32) {
    %c0_i32 = arith.constant 0 : i32
    %c0_i32_0 = arith.constant 0 : i32
    return %arg0, %c0_i32, %arg1 : i32, i32, i32
  }
  func.func @transform_2(%arg0: i32, %arg1: i32, %arg2: i32) -> (i32, i32, i32) {
    %c0_i32 = arith.constant 0 : i32
    %c0_i32_0 = arith.constant 0 : i32
    return %arg0, %c0_i32, %arg1 : i32, i32, i32
  }
  func.func @transform_3(%arg0: i32, %arg1: i32, %arg2: i32) -> (i32, i32, i32) {
    %c0_i32 = arith.constant 0 : i32
    %c0_i32_0 = arith.constant 0 : i32
    return %arg0, %c0_i32, %arg1 : i32, i32, i32
  }
}

</mosaic_0001>

<llo_original>
// kernel: tpu_custom_call.1
$region0: #{tpu_custom_call.1}
  #allocation0 [shape = 'u32[]', space=smem, size = 0x4, offset = 0x4, fixed_abs, tag = 'smem constant byte address 0x4 - core index']
  #allocation1 [shape = 'u32[72,128]{1,0:T(1,128)}', space=vmem, size = 0x9000, scoped, tag = 'internal scratch']
  #allocation2 [shape = 'f32[8,48]{1,0:T(8,128)}', space=vmem, size = 0x1000, scoped, tag = 'scratch operand']
  #allocation3 [shape = 'f32[8,48]{1,0:T(8,128)}', space=vmem, size = 0x1000, scoped, tag = 'scratch operand']
  %s0 = inlined_call_operand.hbm [shape: f32[2,32,48], index: 0, kind: input, shape index: {}]
  %s1 = inlined_call_operand.hbm [shape: s32[2,1,48], index: 1, kind: input, shape index: {}]
  %s2 = inlined_call_operand.hbm [shape: f32[2,1,48], index: 2, kind: output, shape index: {0}]
  %s3 = inlined_call_operand.hbm [shape: f32[2,1,48], index: 3, kind: output, shape index: {1}]
  %4 = xla_tuple %s2, %s3
  %s5 = sld [smem:[#allocation0]]
  $region65: #{tpu_custom_call.1} parent=0
    _
  %s7 = ssub.s32 1, %s5
  %s8 = scalar_select 0, %s7, %s5
  $region1: #{tpu_custom_call.1} parent=0
    #allocation4 [shape = 'u8[32768]{0}', space=vmem, size = 0x8000, scoped, tag = 'input window, operand 0']
    #allocation5 [shape = 's32[2]{0}', space=sflag, size = 0x8, scoped, tag = 'scoped memory for tpu_custom_call.1']
    #allocation6 [shape = 's32[2]{0}', space=sflag, size = 0x8, scoped, tag = 'scoped memory for tpu_custom_call.1']
    #allocation7 [shape = 'u8[1024]{0}', space=vmem, size = 0x400, scoped, tag = 'input window, operand 1']
    #allocation8 [shape = 's32[2]{0}', space=sflag, size = 0x8, scoped, tag = 'scoped memory for tpu_custom_call.1']
    #allocation9 [shape = 'u8[1024]{0}', space=vmem, size = 0x400, scoped, tag = 'output window, operand 0']
    #allocation10 [shape = 'u8[1024]{0}', space=vmem, size = 0x400, scoped, tag = 'output window, operand 1']
    #allocation11 [shape = 's32[2]{0}', space=sflag, size = 0x8, scoped, tag = 'scoped memory for tpu_custom_call.1']
    %9 = vsyncpa [#allocation5], 0
    %s10 = scalar_lea.sflag [#allocation5], 1
    %11 = vsyncpa %s10, 0
    %12 = vsyncpa [#allocation8], 0
    %s13 = scalar_lea.sflag [#allocation8], 1
    %14 = vsyncpa %s13, 0
    %15 = vsyncpa [#allocation6], 0
    %s16 = scalar_lea.sflag [#allocation6], 1
    %17 = vsyncpa %s16, 0
    %18 = vsyncpa [#allocation11], 0
    %s19 = scalar_lea.sflag [#allocation11], 1
    %20 = vsyncpa %s19, 0
    loop: start=0, step=1, limit=4
    $region2: #{tpu_custom_call.1} parent=1 // loop_pre_header
      _
    $region3: #{tpu_custom_call.1} parent=1 // loop_header
      %s22 = sphi 0, %s26
      %p23 = scmp.ge.s32.totalorder %s22, 4
      %s29 = sphi 0, %s48
      %s30 = sphi 0, %s44
      %s31 = sphi 0, %s40
      %s32 = sphi 0, %s29
      %s33 = sphi 0, %s30
      %s34 = sphi 0, %s31
      %s35 = sphi 0, %s32
      %s36 = sphi 0, %s33
      %s37 = sphi 0, %s34
      %s55 = sphi 0, %s57
      %s58 = sphi 0, %s55
      %s59 = sphi 0, %s58
      %s75 = sphi 0, %s59
      %s83 = sphi 0, %s85
      %s86 = sphi 0, %s83
      %s87 = sphi 0, %s86
      %s103 = sphi 0, %s87
      %s111 = sphi 0, %s113
      %s114 = sphi 0, %s111
      %s115 = sphi 0, %s114
      %s131 = sphi 0, %s115
      %s139 = sphi 0, %s141
      %s142 = sphi 0, %s139
      %s143 = sphi 0, %s142
      %s159 = sphi 0, %s143
    $region4: #{tpu_custom_call.1} parent=1 // loop_header_branch
      %25 = sbr.rel (%p23) target = $region8
    $region5: #{tpu_custom_call.1} parent=1 // loop_body
      %s27 = ssub.s32 %s22, 1
      %s28 = ssub.s32 %s22, 2
      %s38 = sadd.s32 1, %s31
      %p39 = scmp.ge.s32.totalorder %s38, 1
      %s40 = scalar_select %p39, 0, %s38
      %s41 = sadd.s32 1, %s30
      %s42 = scalar_select %p39, %s41, %s30
      %p43 = scmp.ge.s32.totalorder %s42, 1
      %s44 = scalar_select %p43, 0, %s42
      %s45 = sadd.s32 1, %s29
      %s46 = scalar_select %p43, %s45, %s29
      %p47 = scmp.ge.s32.totalorder %s46, 2
      %s48 = scalar_select %p47, 0, %s46
      %s49 = ssub.s32 %s29, %s48
      %s50 = ssub.s32 %s31, %s40
      %s51 = sor.u32 %s49, %s50
      %s52 = ssub.s32 %s30, %s44
      %s53 = sor.u32 %s51, %s52
      %p54 = scmp.eq.s32.totalorder %s53, 0
      %s56 = sadd.s32 %s55, 1
      %s57 = scalar_select %p54, %s55, %s56
      %p60 = pneg %p54
      %p61 = scmp.eq.s32.totalorder %s22, 1
      %p62 = por %p60, %p61
      %p63 = scmp.ne.s32.totalorder %s55, %s58
      %p64 = scmp.eq.s32.totalorder %s22, 0
      %p65 = por %p63, %p64
      %p66 = scmp.ne.s32.totalorder %s55, %s58
      %p67 = scmp.eq.s32.totalorder %s27, 1
      %p68 = por %p66, %p67
      %p69 = scmp.ne.s32.totalorder %s58, %s59
      %p70 = scmp.eq.s32.totalorder %s27, 0
      %p71 = por %p69, %p70
      %p72 = scmp.ne.s32.totalorder %s58, %s59
      %p73 = scmp.eq.s32.totalorder %s28, 1
      %p74 = por %p72, %p73
      %p76 = scmp.ne.s32.totalorder %s59, %s75
      %p77 = scmp.eq.s32.totalorder %s28, 0
      %p78 = por %p76, %p77
      %s79 = ssub.s32 %s29, %s48
      %s80 = ssub.s32 %s30, %s44
      %s81 = sor.u32 %s79, %s80
      %p82 = scmp.eq.s32.totalorder %s81, 0
      %s84 = sadd.s32 %s83, 1
      %s85 = scalar_select %p82, %s83, %s84
      %p88 = pneg %p82
      %p89 = scmp.eq.s32.totalorder %s22, 1
      %p90 = por %p88, %p89
      %p91 = scmp.ne.s32.totalorder %s83, %s86
      %p92 = scmp.eq.s32.totalorder %s22, 0
      %p93 = por %p91, %p92
      %p94 = scmp.ne.s32.totalorder %s83, %s86
      %p95 = scmp.eq.s32.totalorder %s27, 1
      %p96 = por %p94, %p95
      %p97 = scmp.ne.s32.totalorder %s86, %s87
      %p98 = scmp.eq.s32.totalorder %s27, 0
      %p99 = por %p97, %p98
      %p100 = scmp.ne.s32.totalorder %s86, %s87
      %p101 = scmp.eq.s32.totalorder %s28, 1
      %p102 = por %p100, %p101
      %p104 = scmp.ne.s32.totalorder %s87, %s103
      %p105 = scmp.eq.s32.totalorder %s28, 0
      %p106 = por %p104, %p105
      %s107 = ssub.s32 %s29, %s48
      %s108 = ssub.s32 %s30, %s44
      %s109 = sor.u32 %s107, %s108
      %p110 = scmp.eq.s32.totalorder %s109, 0
      %s112 = sadd.s32 %s111, 1
      %s113 = scalar_select %p110, %s111, %s112
      %p116 = pneg %p110
      %p117 = scmp.eq.s32.totalorder %s22, 1
      %p118 = por %p116, %p117
      %p119 = scmp.ne.s32.totalorder %s111, %s114
      %p120 = scmp.eq.s32.totalorder %s22, 0
      %p121 = por %p119, %p120
      %p122 = scmp.ne.s32.totalorder %s111, %s114
      %p123 = scmp.eq.s32.totalorder %s27, 1
      %p124 = por %p122, %p123
      %p125 = scmp.ne.s32.totalorder %s114, %s115
      %p126 = scmp.eq.s32.totalorder %s27, 0
      %p127 = por %p125, %p126
      %p128 = scmp.ne.s32.totalorder %s114, %s115
      %p129 = scmp.eq.s32.totalorder %s28, 1
      %p130 = por %p128, %p129
      %p132 = scmp.ne.s32.totalorder %s115, %s131
      %p133 = scmp.eq.s32.totalorder %s28, 0
      %p134 = por %p132, %p133
      %s135 = ssub.s32 %s29, %s48
      %s136 = ssub.s32 %s30, %s44
      %s137 = sor.u32 %s135, %s136
      %p138 = scmp.eq.s32.totalorder %s137, 0
      %s140 = sadd.s32 %s139, 1
      %s141 = scalar_select %p138, %s139, %s140
      %p144 = pneg %p138
      %p145 = scmp.eq.s32.totalorder %s22, 1
      %p146 = por %p144, %p145
      %p147 = scmp.ne.s32.totalorder %s139, %s142
      %p148 = scmp.eq.s32.totalorder %s22, 0
      %p149 = por %p147, %p148
      %p150 = scmp.ne.s32.totalorder %s139, %s142
      %p151 = scmp.eq.s32.totalorder %s27, 1
      %p152 = por %p150, %p151
      %p153 = scmp.ne.s32.totalorder %s142, %s143
      %p154 = scmp.eq.s32.totalorder %s27, 0
      %p155 = por %p153, %p154
      %p156 = scmp.ne.s32.totalorder %s142, %s143
      %p157 = scmp.eq.s32.totalorder %s28, 1
      %p158 = por %p156, %p157
      %p160 = scmp.ne.s32.totalorder %s143, %s159
      %p161 = scmp.eq.s32.totalorder %s28, 0
      %p162 = por %p160, %p161
      %p163 = scmp.le.s32.totalorder 1, %s22
      %p164 = scmp.lt.s32.totalorder %s22, 3
      %p165 = pnand %p163, %p164
      %p166 = pneg %p165
      // Predicated region
      $region9: #{tpu_custom_call.1} parent=5 // pred_check
        _
      $region10: #{tpu_custom_call.1} parent=5 // pred_check_branch
        %168 = sbr.rel (%p165) target = $region12
      $region11: #{tpu_custom_call.1} parent=5 // pred_region
        %s169 = ssub.s32 %s22, 1
      $region12: #{tpu_custom_call.1} parent=5 // pred_fallthru
        _
      %p170 = scmp.lt.s32.totalorder %s22, 2
      // Predicated region
      $region13: #{tpu_custom_call.1} parent=5 // pred_check
        %p171 = pneg %p170
      $region14: #{tpu_custom_call.1} parent=5 // pred_check_branch
        %173 = sbr.rel (%p171) target = $region16
      $region15: #{tpu_custom_call.1} parent=5 // pred_region
        // Predicated region
        $region17: #{tpu_custom_call.1} parent=15 // pred_check
          %p174 = pneg %p65
        $region18: #{tpu_custom_call.1} parent=15 // pred_check_branch
          %176 = sbr.rel (%p174) target = $region20
        $region19: #{tpu_custom_call.1} parent=15 // pred_region
          %s177 = sand.u32 %s55, 1
          %s178 = scalar_lea.sflag [#allocation5], %s177
          %s179 = sand.u32 %s55, 1
          %s180 = smul.addr %s179, 32
          %s181 = scalar_lea.vmem [#allocation4], %s180
          %s182 = smul.u32 4, %s31
          %184 = vsyncadd %s178, 0
          %s185 = sadd.s32 %s30, %s182
          %s186 = smul.addr %s29, 4
          %s187 = sadd.s32 %s185, %s186
          %s188 = smul.addr %s187, 8
          %s189 = scalar_lea.hbm %s0, %s188
          %s190 = sshll.u32 %s189, 4
          %s191 = int_to_ptr.hbm [resolvable:$true] %s190
          %s192 = sshll.u32 %s181, 4
          %s193 = int_to_ptr.vmem [resolvable:$true] %s192
          %198 = dma.hbm_to_vmem [thread:$0]  %s191, 512, %s193, %s178, 128, 128, 8
        $region20: #{tpu_custom_call.1} parent=15 // pred_fallthru
          _
        // Predicated region
        $region21: #{tpu_custom_call.1} parent=15 // pred_check
          %p199 = pneg %p93
        $region22: #{tpu_custom_call.1} parent=15 // pred_check_branch
          %201 = sbr.rel (%p199) target = $region24
        $region23: #{tpu_custom_call.1} parent=15 // pred_region
          %s202 = sand.u32 %s83, 1
          %s203 = scalar_lea.sflag [#allocation8], %s202
          %s204 = sand.u32 %s83, 1
          %s205 = scalar_lea.vmem [#allocation7], %s204
          %207 = vsyncadd %s203, 0
          %s208 = sadd.s32 %s30, %s29
          %s209 = scalar_lea.hbm %s1, %s208
          %s211 = sshll.u32 %s209, 4
          %s212 = int_to_ptr.hbm [resolvable:$true] %s211
          %s213 = sshll.u32 %s205, 4
          %s214 = int_to_ptr.vmem [resolvable:$true] %s213
          %216 = dma.hbm_to_vmem [thread:$0]  %s212, 16, %s214, %s203
        $region24: #{tpu_custom_call.1} parent=15 // pred_fallthru
          _
      $region16: #{tpu_custom_call.1} parent=5 // pred_fallthru
        _
      %p217 = scmp.le.s32.totalorder 1, %s22
      %p218 = scmp.lt.s32.totalorder %s22, 3
      %p219 = pnand %p217, %p218
      %p220 = pneg %p219
      // Predicated region
      $region25: #{tpu_custom_call.1} parent=5 // pred_check
        _
      $region26: #{tpu_custom_call.1} parent=5 // pred_check_branch
        %222 = sbr.rel (%p219) target = $region28
      $region27: #{tpu_custom_call.1} parent=5 // pred_region
        %s223 = ssub.s32 %s22, 1
        %s224 = sand.u32 %s58, 1
        %s225 = scalar_lea.sflag [#allocation5], %s224
        %s226 = sand.u32 %s58, 1
        %s227 = smul.addr %s226, 32
        %s228 = scalar_lea.vmem [#allocation4], %s227
        // Predicated region
        $region29: #{tpu_custom_call.1} parent=27 // pred_check
          %p229 = pneg %p71
        $region30: #{tpu_custom_call.1} parent=27 // pred_check_branch
          %231 = sbr.rel (%p229) target = $region32
        $region31: #{tpu_custom_call.1} parent=27 // pred_region
          %233 = dma.done %s225, 512
        $region32: #{tpu_custom_call.1} parent=27 // pred_fallthru
          _
        %s234 = sand.u32 %s86, 1
        %s235 = scalar_lea.sflag [#allocation8], %s234
        %s236 = sand.u32 %s86, 1
        %s237 = scalar_lea.vmem [#allocation7], %s236
        // Predicated region
        $region33: #{tpu_custom_call.1} parent=27 // pred_check
          %p238 = pneg %p99
        $region34: #{tpu_custom_call.1} parent=27 // pred_check_branch
          %240 = sbr.rel (%p238) target = $region36
        $region35: #{tpu_custom_call.1} parent=27 // pred_region
          %242 = dma.done %s235, 16
        $region36: #{tpu_custom_call.1} parent=27 // pred_fallthru
          _
        %s243 = sand.u32 %s58, 1
        %s244 = scalar_lea.sflag [#allocation5], %s243
        %s245 = sand.u32 %s58, 1
        %s246 = smul.addr %s245, 32
        %s247 = scalar_lea.vmem [#allocation4], %s246
        %p248 = pneg %p71
        %p249 = pneg %p68
        %s250 = sand.u32 %s86, 1
        %s251 = scalar_lea.sflag [#allocation8], %s250
        %s252 = sand.u32 %s86, 1
        %s253 = scalar_lea.vmem [#allocation7], %s252
        %p254 = pneg %p99
        %p255 = pneg %p96
        %p256 = pneg %p127
        %p257 = pneg %p124
        %s258 = sand.u32 %s114, 1
        %s259 = scalar_lea.sflag [#allocation6], %s258
        %s260 = sand.u32 %s114, 1
        %s261 = scalar_lea.vmem [#allocation9], %s260
        %p262 = pneg %p155
        %p263 = pneg %p152
        %s264 = sand.u32 %s142, 1
        %s265 = scalar_lea.sflag [#allocation11], %s264
        %s266 = sand.u32 %s142, 1
        %s267 = scalar_lea.vmem [#allocation10], %s266
        %s268 = smul.u32 4, %s34
        %v269 = vld [vmem:[%s228] sm:$0xff]
        %v270 = vld [vmem:[%s228 + $0x8] sm:$0xff]
        %v271 = vld [vmem:[%s228 + $0x10] sm:$0xff]
        %v272 = vld [vmem:[%s228 + $0x18] sm:$0xff]
        %v273 = vld [vmem:[%s237] sm:$0x1]
        %p274 = scmp.eq.s32.totalorder %s34, 0
        // Predicated region
        $region37: #{tpu_custom_call.1} parent=27 // pred_check
          %p275 = pneg %p274
        $region38: #{tpu_custom_call.1} parent=27 // pred_check_branch
          %277 = sbr.rel (%p275) target = $region40
        $region39: #{tpu_custom_call.1} parent=27 // pred_region
          %vm278 = vcmask 392192
          %279 = vst.msk [vmem:[#allocation2] sm:$0xff] %vm278, 0.0
          %280 = vst.msk [vmem:[#allocation3] sm:$0xff] %vm278, 0.0
        $region40: #{tpu_custom_call.1} parent=27 // pred_fallthru
          _
        %v281 = vlaneseq
        %v282 = vshrl.u32 %v281, 7
        %v283 = vadd.s32 %v282, 8
        %v284 = vadd.s32 %v282, 16
        %v285 = vadd.s32 %v282, 24
        %s286 = smul.u32 %s34, 32
        %v287 = vstv %s286
        %v288 = vsub.s32 %v273, %v287
        %v289 = vperm.slane %v288, 0
        %vm290 = vcmp.eq.s32.totalorder %v282, %v289
        %vm291 = vcmp.eq.s32.totalorder %v283, %v289
        %vm292 = vcmp.eq.s32.totalorder %v284, %v289
        %vm293 = vcmp.eq.s32.totalorder %v285, %v289
        %v294 = vsel %vm290, %v269, 0.0
        %v295 = vsel %vm291, %v270, 0.0
        %v296 = vsel %vm292, %v271, 0.0
        %v297 = vsel %vm293, %v272, 0.0
        %v298 = vld [vmem:[#allocation2] sm:$0xff]
        %vm299 = vcmask 392192
        %v300 = vsel %vm299, %v269, 0.0
        %v301 = vsel %vm299, %v270, 0.0
        %v302 = vadd.f32 %v300, %v301
        %v303 = vsel %vm299, %v271, 0.0
        %v304 = vadd.f32 %v302, %v303
        %v305 = vsel %vm299, %v272, 0.0
        %v306 = vadd.f32 %v304, %v305
        %v307 = vadd.f32 %v298, %v306
        %308 = vst.msk [vmem:[#allocation2] sm:$0xff] %vm299, %v307
        %v309 = vld [vmem:[#allocation3] sm:$0xff]
        %v310 = vsel %vm299, %v294, 0.0
        %v311 = vsel %vm299, %v295, 0.0
        %v312 = vadd.f32 %v310, %v311
        %v313 = vsel %vm299, %v296, 0.0
        %v314 = vadd.f32 %v312, %v313
        %v315 = vsel %vm299, %v297, 0.0
        %v316 = vadd.f32 %v314, %v315
        %v317 = vadd.f32 %v309, %v316
        %318 = vst.msk [vmem:[#allocation3] sm:$0xff] %vm299, %v317
        // Predicated region
        $region41: #{tpu_custom_call.1} parent=27 // pred_check
          %p319 = pneg %p274
        $region42: #{tpu_custom_call.1} parent=27 // pred_check_branch
          %321 = sbr.rel (%p319) target = $region44
        $region43: #{tpu_custom_call.1} parent=27 // pred_region
          %v322 = vld [vmem:[#allocation2] sm:$0xff]
          %v323 = vsel %vm299, %v322, 0.0
          %v324 = vrot.slane %v323, 4
          %v325 = vadd.f32 %v323, %v324
          %v326 = vrot.slane %v325, 2
          %v327 = vadd.f32 %v325, %v326
          %v328 = vrot.slane %v327, 1
          %v329 = vadd.f32 %v327, %v328
          %vm330 = vcmask 385024
          %331 = vst.msk [vmem:[%s261] sm:$0x1] %vm330, %v329
          %v332 = vld [vmem:[#allocation3] sm:$0xff]
          %v333 = vsel %vm299, %v332, 0.0
          %v334 = vrot.slane %v333, 4
          %v335 = vadd.f32 %v333, %v334
          %v336 = vrot.slane %v335, 2
          %v337 = vadd.f32 %v335, %v336
          %v338 = vrot.slane %v337, 1
          %v339 = vadd.f32 %v337, %v338
          %340 = vst.msk [vmem:[%s267] sm:$0x1] %vm330, %v339
        $region44: #{tpu_custom_call.1} parent=27 // pred_fallthru
          _
        %s341 = sand.u32 %s114, 1
        %s342 = scalar_lea.sflag [#allocation6], %s341
        %s343 = sand.u32 %s114, 1
        %s344 = scalar_lea.vmem [#allocation9], %s343
        %s345 = sand.u32 %s142, 1
        %s346 = scalar_lea.sflag [#allocation11], %s345
        %s347 = sand.u32 %s142, 1
        %s348 = scalar_lea.vmem [#allocation10], %s347
        // Predicated region
        $region45: #{tpu_custom_call.1} parent=27 // pred_check
          %p349 = pneg %p124
        $region46: #{tpu_custom_call.1} parent=27 // pred_check_branch
          %351 = sbr.rel (%p349) target = $region48
        $region47: #{tpu_custom_call.1} parent=27 // pred_region
          %353 = vsyncadd %s342, 0
          %s354 = sadd.s32 %s33, %s32
          %s355 = scalar_lea.hbm %s2, %s354
          %s357 = sshll.u32 %s344, 4
          %s358 = int_to_ptr.vmem [resolvable:$true] %s357
          %s359 = sshll.u32 %s355, 4
          %s360 = int_to_ptr.hbm [resolvable:$true] %s359
          %362 = dma.vmem_to_hbm [thread:$0]  %s358, 16, %s360, %s342
        $region48: #{tpu_custom_call.1} parent=27 // pred_fallthru
          _
        // Predicated region
        $region49: #{tpu_custom_call.1} parent=27 // pred_check
          %p363 = pneg %p152
        $region50: #{tpu_custom_call.1} parent=27 // pred_check_branch
          %365 = sbr.rel (%p363) target = $region52
        $region51: #{tpu_custom_call.1} parent=27 // pred_region
          %367 = vsyncadd %s346, 0
          %s368 = sadd.s32 %s33, %s32
          %s369 = scalar_lea.hbm %s3, %s368
          %s371 = sshll.u32 %s348, 4
          %s372 = int_to_ptr.vmem [resolvable:$true] %s371
          %s373 = sshll.u32 %s369, 4
          %s374 = int_to_ptr.hbm [resolvable:$true] %s373
          %376 = dma.vmem_to_hbm [thread:$0]  %s372, 16, %s374, %s346
        $region52: #{tpu_custom_call.1} parent=27 // pred_fallthru
          _
      $region28: #{tpu_custom_call.1} parent=5 // pred_fallthru
        _
      %p377 = scmp.le.s32.totalorder 2, %s22
      // Predicated region
      $region53: #{tpu_custom_call.1} parent=5 // pred_check
        %p378 = pneg %p377
      $region54: #{tpu_custom_call.1} parent=5 // pred_check_branch
        %380 = sbr.rel (%p378) target = $region56
      $region55: #{tpu_custom_call.1} parent=5 // pred_region
        %s381 = ssub.s32 %s22, 2
        // Predicated region
        $region57: #{tpu_custom_call.1} parent=55 // pred_check
          %p382 = pneg %p130
        $region58: #{tpu_custom_call.1} parent=55 // pred_check_branch
          %384 = sbr.rel (%p382) target = $region60
        $region59: #{tpu_custom_call.1} parent=55 // pred_region
          %s385 = sand.u32 %s115, 1
          %s386 = scalar_lea.sflag [#allocation6], %s385
          %s387 = sand.u32 %s115, 1
          %s388 = scalar_lea.vmem [#allocation9], %s387
          %390 = dma.done %s386, 16
        $region60: #{tpu_custom_call.1} parent=55 // pred_fallthru
          _
        // Predicated region
        $region61: #{tpu_custom_call.1} parent=55 // pred_check
          %p391 = pneg %p158
        $region62: #{tpu_custom_call.1} parent=55 // pred_check_branch
          %393 = sbr.rel (%p391) target = $region64
        $region63: #{tpu_custom_call.1} parent=55 // pred_region
          %s394 = sand.u32 %s143, 1
          %s395 = scalar_lea.sflag [#allocation11], %s394
          %s396 = sand.u32 %s143, 1
          %s397 = scalar_lea.vmem [#allocation10], %s396
          %399 = dma.done %s395, 16
        $region64: #{tpu_custom_call.1} parent=55 // pred_fallthru
          _
      $region56: #{tpu_custom_call.1} parent=5 // pred_fallthru
        _
    $region6: #{tpu_custom_call.1} parent=1 // loop_footer
      %s26 = sadd.s32 1, %s22
    $region7: #{tpu_custom_call.1} parent=1 // loop_footer_branch
      %21 = sbr.rel target = $region3
    $region8: #{tpu_custom_call.1} parent=1 // loop_exit
      _
    %400 = vsyncpa [#allocation5], 1
    %s401 = scalar_lea.sflag [#allocation5], 1
    %402 = vsyncpa %s401, 1
    %403 = vsyncpa [#allocation8], 1
    %s404 = scalar_lea.sflag [#allocation8], 1
    %405 = vsyncpa %s404, 1
    %406 = vsyncpa [#allocation6], 1
    %s407 = scalar_lea.sflag [#allocation6], 1
    %408 = vsyncpa %s407, 1
    %409 = vsyncpa [#allocation11], 1
    %s410 = scalar_lea.sflag [#allocation11], 1
    %411 = vsyncpa %s410, 1

</llo_original>
